<compile_context>
chip_gen: v5e
topology: v5e:2x2
jax: 0.10.0
libtpu: 0.0.40
codegen_flags: <defaults>
</compile_context>

<pallas_src>
import functools

import jax
import jax.numpy as jnp
from jax import lax
from jax.experimental import pallas as pl
from jax.experimental.pallas import tpu as pltpu


_ROW_TILE = 256    # MXU-facing output tiles
_COL_TILE = 256
_K_TILE = 512      # contracting-dim (feature) tile
_LOSS_TILE = 512   # robust loss is mem-bound; 512 tiles ~85% of HBM roofline


def _pick_tile(dim: int, target: int, align: int, floor: int | None = None) -> int:
    """Largest `align`-aligned tile <= target that divides dim, else full dim."""
    floor = align if floor is None else floor
    t = min(target, dim)
    t -= t % align
    while t >= floor:
        if dim % t == 0:
            return t
        t -= align
    # TODO(synk): pad + mask truly ragged dims instead of the full-extent fallback.
    return dim


# ----------------------------------------------------------------------------
# Kernels
# ----------------------------------------------------------------------------
def _cossim_kernel(a_ref, b_ref, o_ref, acc_ref, a_side_ref, b_side_ref):
    """o[i, j] = <a_i, b_j> / (max(|a_i|, eps) * max(|b_j|, eps)), eps=1e-8."""
    j = pl.program_id(1)
    k = pl.program_id(2)
    nk = pl.num_programs(2)
    eps2 = jnp.float32(1e-16)  # eps^2

    @pl.when(k == 0)
    def _init_block():
        acc_ref[...] = jnp.zeros_like(acc_ref)
        b_side_ref[...] = jnp.zeros_like(b_side_ref)

    @pl.when((k == 0) & (j == 0))
    def _init_row_block():
        a_side_ref[...] = jnp.zeros_like(a_side_ref)

    a = a_ref[...]
    b = b_ref[...]

    # MXU matmul in the inputs' native dtype (pass bf16 inputs for the fast
    # MXU path); normalization scales are applied to the f32 output instead of
    # the operands (saves ~2*(tm+tn)*d VPU multiplies per step, keeps f32 math).
    acc_ref[...] += lax.dot_general(
        a, b, dimension_numbers=(((1,), (1,)), ((), ())),
        preferred_element_type=jnp.float32)

    # A-side sum-of-squares: computed only for the first column block of each
    # row block (cached in scratch across the inner j loop), accumulated over k.
    @pl.when(j == 0)
    def _a_sumsq():
        a32 = a.astype(jnp.float32)
        a_side_ref[...] += jnp.sum(a32 * a32, axis=1, keepdims=True)

    # B-side sum-of-squares, lane-dense [1, tn] via a 1-row ones matmul.
    b32 = b.astype(jnp.float32)
    ones_row = jnp.ones((1, b.shape[1]), jnp.float32)
    b_side_ref[...] += lax.dot_general(
        ones_row, b32 * b32, dimension_numbers=(((1,), (1,)), ((), ())),
        preferred_element_type=jnp.float32)

    @pl.when(k == nk - 1)
    def _finalize():
        # rsqrt(max(ss, eps^2)) == 1 / max(norm, eps); runs on the EUP.
        a_scale = lax.rsqrt(jnp.maximum(a_side_ref[...], eps2))   # [tm, 1]
        b_scale = lax.rsqrt(jnp.maximum(b_side_ref[...], eps2))   # [1, tn]
        o_ref[...] = (acc_ref[...] * a_scale * b_scale).astype(o_ref.dtype)


def _sim_matrix_kernel(a_ref, b_ref, o_ref, acc_ref, a_side_ref, b_side_ref):
    """Tanimoto-style similarity: |a_i & b_j| / |a_i | b_j|."""
    j = pl.program_id(1)
    k = pl.program_id(2)
    nk = pl.num_programs(2)

    @pl.when(k == 0)
    def _init_block():
        acc_ref[...] = jnp.zeros_like(acc_ref)
        b_side_ref[...] = jnp.zeros_like(b_side_ref)

    @pl.when((k == 0) & (j == 0))
    def _init_row_block():
        a_side_ref[...] = jnp.zeros_like(a_side_ref)

    # 0/1 operands in bf16: exact values, fast MXU path on v5e/v6e/v7x
    # (v7x has no integer MXU path), f32 accumulation.
    a_bool = (a_ref[...] > 0.0).astype(jnp.bfloat16)
    b_bool = (b_ref[...] > 0.0).astype(jnp.bfloat16)

    acc_ref[...] += lax.dot_general(
        a_bool, b_bool, dimension_numbers=(((1,), (1,)), ((), ())),
        preferred_element_type=jnp.float32)

    # A-side popcount only at j == 0 (cached across the inner j loop).
    @pl.when(j == 0)
    def _a_cnt():
        a_side_ref[...] += jnp.sum(a_bool.astype(jnp.float32), axis=1,
                                   keepdims=True)

    # B-side popcount lane-dense [1, tn] via a 1-row ones matmul.
    ones_row = jnp.ones((1, b_bool.shape[1]), jnp.bfloat16)
    b_side_ref[...] += lax.dot_general(
        ones_row, b_bool, dimension_numbers=(((1,), (1,)), ((), ())),
        preferred_element_type=jnp.float32)

    @pl.when(k == nk - 1)
    def _finalize():
        and_res = acc_ref[...]
        # |a or b| = |a| + |b| - |a and b|  — second full matmul removed.
        or_res = a_side_ref[...] + b_side_ref[...] - and_res
        # Exact reciprocal (keeps parity with the torch reference); set
        # approx=True to move the divide fully onto the idle EUP slot.
        o_ref[...] = (and_res * pl.reciprocal(or_res, approx=False)
                      ).astype(o_ref.dtype)


def _robust_sq_err_kernel(idx_ref, a_ref, b_ref, o_ref, acc_ref, *, k_sel, tm):
    """Huber-like loss, gather rows by topk_idx along dim 0, per-row-block sum."""
    i = pl.program_id(0)
    j = pl.program_id(1)

    @pl.when(j == 0)
    def _init():
        acc_ref[...] = jnp.zeros_like(acc_ref)

    a = a_ref[...].astype(jnp.float32)
    b = b_ref[...].astype(jnp.float32)
    diff = a - b
    abs_diff = jnp.abs(diff)
    # Single select: d^2 where |d| <= 2, else (|d| - 2) + 4 == |d| + 2.
    loss = jnp.where(abs_diff <= 2.0, diff * diff, abs_diff + 2.0)

    blk_m, blk_n = loss.shape
    idx = idx_ref[...]                                           # [K, tn] int32
    row_ids = lax.broadcasted_iota(jnp.int32, (blk_m, blk_n), 0) + i * tm
    # Selection-count: O(K) VPU compares, no [K, M, N] one-hot tensor.
    # K is small & static -> plain Python loop (fully unrolled at trace time).
    cnt = jnp.zeros((blk_m, blk_n), jnp.float32)
    for kk in range(k_sel):
        cnt = cnt + (idx[kk:kk + 1, :] == row_ids).astype(jnp.float32)

    # Sublane-only partial reduce per step; cross-lane reduce deferred.
    acc_ref[...] += jnp.sum(cnt * loss, axis=0, keepdims=True)

    @pl.when(j == pl.num_programs(1) - 1)
    def _finalize():
        # One cross-lane reduce per row block; the per-block partial is written
        # lane-dense (broadcast over the (1,8,128) block) and summed outside.
        total = jnp.sum(acc_ref[...])
        o_ref[...] = total + jnp.zeros(o_ref.shape, jnp.float32)


# ----------------------------------------------------------------------------
# Wrappers
# ----------------------------------------------------------------------------
def _sim_like_call(kernel, a, b):
    m, d = a.shape
    n, d2 = b.shape
    assert d == d2
    tm = _pick_tile(m, _ROW_TILE, 8, 64)
    tn = _pick_tile(n, _COL_TILE, 128)
    tk = _pick_tile(d, _K_TILE, 128)
    grid = (m // tm, n // tn, d // tk)
    return pl.pallas_call(
        kernel,
        out_shape=jax.ShapeDtypeStruct((m, n), jnp.float32),
        grid=grid,
        in_specs=[
            pl.BlockSpec((tm, tk), lambda i, j, k: (i, k)),
            pl.BlockSpec((tn, tk), lambda i, j, k: (j, k)),
        ],
        out_specs=pl.BlockSpec((tm, tn), lambda i, j, k: (i, j)),
        scratch_shapes=[
            pltpu.VMEM((tm, tn), jnp.float32),   # dot / AND accumulator
            pltpu.VMEM((tm, 1), jnp.float32),    # A-side row stats (cached over j)
            pltpu.VMEM((1, tn), jnp.float32),    # B-side row stats (lane-dense)
        ],
        compiler_params=pltpu.CompilerParams(
            # Only the i axis may be split across TensorCores: the A-side
            # scratch is filled only at j == 0 and the k axis is a reduction.
            dimension_semantics=("parallel", "arbitrary", "arbitrary")),
    )(a, b)


def cossim_matrix(a, b):
    return _sim_like_call(_cossim_kernel, a, b)


def get_sim_matrix(a, b):
    return _sim_like_call(_sim_matrix_kernel, a, b)


def robust_square_error(a, b, topk_idx):
    m, n = a.shape
    k, n2 = topk_idx.shape
    assert n == n2 and b.shape == a.shape
    tm = _pick_tile(m, _LOSS_TILE, 8, 64)
    tn = _pick_tile(n, _LOSS_TILE, 128)
    grid = (m // tm, n // tn)
    kernel = functools.partial(_robust_sq_err_kernel, k_sel=k, tm=tm)
    partials = pl.pallas_call(
        kernel,
        out_shape=jax.ShapeDtypeStruct((grid[0], 8, 128), jnp.float32),
        grid=grid,
        in_specs=[
            pl.BlockSpec((k, tn), lambda i, j: (0, j)),
            pl.BlockSpec((tm, tn), lambda i, j: (i, j)),
            pl.BlockSpec((tm, tn), lambda i, j: (i, j)),
        ],
        # Per-row-block partials: independent output blocks let v7x split the
        # (parallel) i axis across both TensorCores without racing a scalar.
        out_specs=pl.BlockSpec((1, 8, 128), lambda i, j: (i, 0, 0)),
        scratch_shapes=[pltpu.VMEM((1, tn), jnp.float32)],
        compiler_params=pltpu.CompilerParams(
            dimension_semantics=("parallel", "arbitrary")),
    )(topk_idx.astype(jnp.int32), a, b)
    return jnp.sum(partials[:, 0, 0]) / jnp.float32(k * n)


# ----------------------------------------------------------------------------
# Pure-JAX references (self-check)
# ----------------------------------------------------------------------------
def _cossim_ref(a, b, eps=1e-08):
    a_n = jnp.linalg.norm(a, axis=1, keepdims=True)
    b_n = jnp.linalg.norm(b, axis=1, keepdims=True)
    return (a / jnp.maximum(a_n, eps)) @ (b / jnp.maximum(b_n, eps)).T


def _sim_ref(a, b):
    a_bool = (a > 0.0).astype(jnp.float32)
    b_bool = (b > 0.0).astype(jnp.float32)
    and_res = a_bool @ b_bool.T
    or_res = a.shape[-1] - (1.0 - a_bool) @ (1.0 - b_bool).T
    return and_res / or_res


def _robust_ref(a, b, idx):
    abs_diff = jnp.abs(a - b)
    sm = (abs_diff <= 2.0).astype(jnp.float32)
    loss = (a - b) ** 2 * sm + ((abs_diff - 2.0) + 4.0) * (1.0 - sm)
    sel = jnp.take_along_axis(loss, idx, axis=0)
    return jnp.mean(sel)


# ----------------------------------------------------------------------------
if __name__ == "__main__":
    key = jax.random.PRNGKey(0)
    keys = jax.random.split(key, 10)

    # --- small shapes consistent with the module --------------------------
    M, N, D = 8, 8, 32
    a = jax.random.normal(keys[0], (M, D), dtype=jnp.float32)
    b = jax.random.normal(keys[1], (N, D), dtype=jnp.float32)

    R, C, K = 16, 8, 4
    a2 = jax.random.normal(keys[2], (R, C), dtype=jnp.float32) * 3.0
    b2 = jax.random.normal(keys[3], (R, C), dtype=jnp.float32) * 3.0
    topk_idx = jax.random.randint(keys[4], (K, C), 0, R, dtype=jnp.int32)

    sim_cos = jax.block_until_ready(cossim_matrix(a, b))
    sim_tan = jax.block_until_ready(get_sim_matrix(a, b))
    loss = jax.block_until_ready(robust_square_error(a2, b2, topk_idx))

    assert jnp.allclose(sim_cos, _cossim_ref(a, b), atol=1e-5)
    assert jnp.allclose(sim_tan, _sim_ref(a, b), atol=1e-5)
    assert jnp.allclose(loss, _robust_ref(a2, b2, topk_idx), atol=1e-5)

    # --- moderate shapes exercising the multi-block / reduction-axis paths -
    M2, N2, D2 = 512, 512, 1024                 # grid (2, 2, 2)
    ab = jax.random.normal(keys[5], (M2, D2), dtype=jnp.float32)
    bb = jax.random.normal(keys[6], (N2, D2), dtype=jnp.float32)
    sim_cos_b = jax.block_until_ready(cossim_matrix(ab, bb))
    sim_tan_b = jax.block_until_ready(get_sim_matrix(ab, bb))
    assert jnp.allclose(sim_cos_b, _cossim_ref(ab, bb), atol=1e-4)
    assert jnp.allclose(sim_tan_b, _sim_ref(ab, bb), atol=1e-4)

    R2, C2 = 640, 1024                           # grid (2, 2), tm = 320
    a3 = jax.random.normal(keys[7], (R2, C2), dtype=jnp.float32) * 3.0
    b3 = jax.random.normal(keys[8], (R2, C2), dtype=jnp.float32) * 3.0
    idx3 = jax.random.randint(keys[9], (K, C2), 0, R2, dtype=jnp.int32)
    loss_b = jax.block_until_ready(robust_square_error(a3, b3, idx3))
    assert jnp.allclose(loss_b, _robust_ref(a3, b3, idx3), rtol=1e-4, atol=1e-3)

    print("KERNEL_OK")
</pallas_src>

<mosaic_0001>
module attributes {stable_mosaic.version = 11 : i64} {
  func.func @_cossim_kernel(%arg0: i32, %arg1: i32, %arg2: i32, %arg3: memref<8x32xf32, #tpu.memory_space<vmem>>, %arg4: memref<8x32xf32, #tpu.memory_space<vmem>>, %arg5: memref<8x8xf32, #tpu.memory_space<vmem>>, %arg6: memref<8x8xf32, #tpu.memory_space<vmem>>, %arg7: memref<8x1xf32, #tpu.memory_space<vmem>>, %arg8: memref<1x8xf32, #tpu.memory_space<vmem>>) attributes {dimension_semantics = [#tpu.dimension_semantics<parallel>, #tpu.dimension_semantics<arbitrary>, #tpu.dimension_semantics<arbitrary>], iteration_bounds = array<i64: 1, 1, 1>, scalar_prefetch = 0 : i64, scratch_operands = 3 : i64, tpu.core_type = #tpu.core_type<tc>, window_params = [{transform_indices = @transform_0, window_bounds = array<i64: 8, 32>}, {transform_indices = @transform_1, window_bounds = array<i64: 8, 32>}, {transform_indices = @transform_2, window_bounds = array<i64: 8, 8>}]} {
    %c0_i32 = arith.constant 0 : i32
    %0 = arith.cmpi eq, %arg2, %c0_i32 : i32
    %1 = arith.extui %0 : i1 to i32
    %c0_i32_0 = arith.constant 0 : i32
    %2 = arith.cmpi ne, %1, %c0_i32_0 : i32
    scf.if %2 {
      %cst_22 = arith.constant 0.000000e+00 : f32
      %26 = vector.broadcast %cst_22 : f32 to vector<8x8xf32>
      %c0_23 = arith.constant 0 : index
      %c0_24 = arith.constant 0 : index
      %27 = vector.load %arg6[%c0_23, %c0_24] : memref<8x8xf32, #tpu.memory_space<vmem>>, vector<8x8xf32>
      tpu.vector_store %arg6[%c0_23, %c0_24], %26 {strides = array<i32>} : memref<8x8xf32, #tpu.memory_space<vmem>>, vector<8x8xf32>,
      %cst_25 = arith.constant 0.000000e+00 : f32
      %28 = vector.broadcast %cst_25 : f32 to vector<1x8xf32>
      %c0_26 = arith.constant 0 : index
      %c0_27 = arith.constant 0 : index
      %29 = vector.load %arg8[%c0_26, %c0_27] : memref<1x8xf32, #tpu.memory_space<vmem>>, vector<1x8xf32>
      tpu.vector_store %arg8[%c0_26, %c0_27], %28 {strides = array<i32>} : memref<1x8xf32, #tpu.memory_space<vmem>>, vector<1x8xf32>,
    } else {
    }
    %c0_i32_1 = arith.constant 0 : i32
    %3 = arith.cmpi eq, %arg2, %c0_i32_1 : i32
    %c0_i32_2 = arith.constant 0 : i32
    %4 = arith.cmpi eq, %arg1, %c0_i32_2 : i32
    %5 = arith.andi %3, %4 : i1
    %6 = arith.extui %5 : i1 to i32
    %c0_i32_3 = arith.constant 0 : i32
    %7 = arith.cmpi ne, %6, %c0_i32_3 : i32
    scf.if %7 {
      %cst_22 = arith.constant 0.000000e+00 : f32
      %26 = vector.broadcast %cst_22 : f32 to vector<8x1xf32>
      %c0_23 = arith.constant 0 : index
      %c0_24 = arith.constant 0 : index
      %27 = vector.load %arg7[%c0_23, %c0_24] : memref<8x1xf32, #tpu.memory_space<vmem>>, vector<8x1xf32>
      tpu.vector_store %arg7[%c0_23, %c0_24], %26 {strides = array<i32>} : memref<8x1xf32, #tpu.memory_space<vmem>>, vector<8x1xf32>,
    } else {
    }
    %c0 = arith.constant 0 : index
    %c0_4 = arith.constant 0 : index
    %8 = vector.load %arg3[%c0, %c0_4] : memref<8x32xf32, #tpu.memory_space<vmem>>, vector<8x32xf32>
    %c0_5 = arith.constant 0 : index
    %c0_6 = arith.constant 0 : index
    %9 = vector.load %arg4[%c0_5, %c0_6] : memref<8x32xf32, #tpu.memory_space<vmem>>, vector<8x32xf32>
    %c0_7 = arith.constant 0 : index
    %c0_8 = arith.constant 0 : index
    %10 = vector.load %arg6[%c0_7, %c0_8] : memref<8x8xf32, #tpu.memory_space<vmem>>, vector<8x8xf32>
    %cst = arith.constant dense<0.000000e+00> : vector<8x8xf32>
    %11 = tpu.matmul %8, %9, %cst {dimension_numbers = #tpu.dot_dimension_numbers<[1], [1], [0], [0], [0, 0, 1, 0], [], []>} : vector<8x32xf32>, vector<8x32xf32>, vector<8x8xf32> -> vector<8x8xf32>
    %12 = arith.addf %10, %11 : vector<8x8xf32>
    %c0_9 = arith.constant 0 : index
    %c0_10 = arith.constant 0 : index
    %13 = vector.load %arg6[%c0_9, %c0_10] : memref<8x8xf32, #tpu.memory_space<vmem>>, vector<8x8xf32>
    tpu.vector_store %arg6[%c0_9, %c0_10], %12 {strides = array<i32>} : memref<8x8xf32, #tpu.memory_space<vmem>>, vector<8x8xf32>,
    %c0_i32_11 = arith.constant 0 : i32
    %14 = arith.cmpi eq, %arg1, %c0_i32_11 : i32
    %15 = arith.extui %14 : i1 to i32
    %c0_i32_12 = arith.constant 0 : i32
    %16 = arith.cmpi ne, %15, %c0_i32_12 : i32
    scf.if %16 {
      %c0_22 = arith.constant 0 : index
      %c0_23 = arith.constant 0 : index
      %26 = vector.load %arg7[%c0_22, %c0_23] : memref<8x1xf32, #tpu.memory_space<vmem>>, vector<8x1xf32>
      %27 = arith.mulf %8, %8 : vector<8x32xf32>
      %cst_24 = arith.constant dense<0.000000e+00> : vector<8xf32>
      %28 = vector.multi_reduction <add>, %27, %cst_24 [1] : vector<8x32xf32> to vector<8xf32>
      %29 = vector.shape_cast %28 : vector<8xf32> to vector<8x1xf32>
      %30 = arith.addf %26, %29 : vector<8x1xf32>
      %c0_25 = arith.constant 0 : index
      %c0_26 = arith.constant 0 : index
      %31 = vector.load %arg7[%c0_25, %c0_26] : memref<8x1xf32, #tpu.memory_space<vmem>>, vector<8x1xf32>
      tpu.vector_store %arg7[%c0_25, %c0_26], %30 {strides = array<i32>} : memref<8x1xf32, #tpu.memory_space<vmem>>, vector<8x1xf32>,
    } else {
    }
    %cst_13 = arith.constant 1.000000e+00 : f32
    %17 = vector.broadcast %cst_13 : f32 to vector<1x32xf32>
    %c0_14 = arith.constant 0 : index
    %c0_15 = arith.constant 0 : index
    %18 = vector.load %arg8[%c0_14, %c0_15] : memref<1x8xf32, #tpu.memory_space<vmem>>, vector<1x8xf32>
    %19 = arith.mulf %9, %9 : vector<8x32xf32>
    %cst_16 = arith.constant dense<0.000000e+00> : vector<1x8xf32>
    %20 = tpu.matmul %17, %19, %cst_16 {dimension_numbers = #tpu.dot_dimension_numbers<[1], [1], [0], [0], [0, 0, 1, 0], [], []>} : vector<1x32xf32>, vector<8x32xf32>, vector<1x8xf32> -> vector<1x8xf32>
    %21 = arith.addf %18, %20 : vector<1x8xf32>
    %c0_17 = arith.constant 0 : index
    %c0_18 = arith.constant 0 : index
    %22 = vector.load %arg8[%c0_17, %c0_18] : memref<1x8xf32, #tpu.memory_space<vmem>>, vector<1x8xf32>
    tpu.vector_store %arg8[%c0_17, %c0_18], %21 {strides = array<i32>} : memref<1x8xf32, #tpu.memory_space<vmem>>, vector<1x8xf32>,
    %c0_i32_19 = arith.constant 0 : i32
    %23 = arith.cmpi eq, %arg2, %c0_i32_19 : i32
    %24 = arith.extui %23 : i1 to i32
    %cst_20 = arith.constant 1.000000e-16 : f32
    %c0_i32_21 = arith.constant 0 : i32
    %25 = arith.cmpi ne, %24, %c0_i32_21 : i32
    scf.if %25 {
      %c0_22 = arith.constant 0 : index
      %c0_23 = arith.constant 0 : index
      %26 = vector.load %arg7[%c0_22, %c0_23] : memref<8x1xf32, #tpu.memory_space<vmem>>, vector<8x1xf32>
      %27 = vector.broadcast %cst_20 : f32 to vector<8x1xf32>
      %28 = arith.maximumf %26, %27 : vector<8x1xf32>
      %29 = math.rsqrt %28 : vector<8x1xf32>
      %c0_24 = arith.constant 0 : index
      %c0_25 = arith.constant 0 : index
      %30 = vector.load %arg8[%c0_24, %c0_25] : memref<1x8xf32, #tpu.memory_space<vmem>>, vector<1x8xf32>
      %31 = vector.broadcast %cst_20 : f32 to vector<1x8xf32>
      %32 = arith.maximumf %30, %31 : vector<1x8xf32>
      %33 = math.rsqrt %32 : vector<1x8xf32>
      %c0_26 = arith.constant 0 : index
      %c0_27 = arith.constant 0 : index
      %34 = vector.load %arg6[%c0_26, %c0_27] : memref<8x8xf32, #tpu.memory_space<vmem>>, vector<8x8xf32>
      %35 = vector.broadcast %29 : vector<8x1xf32> to vector<8x8xf32>
      %36 = arith.mulf %34, %35 : vector<8x8xf32>
      %37 = vector.broadcast %33 : vector<1x8xf32> to vector<8x8xf32>
      %38 = arith.mulf %36, %37 : vector<8x8xf32>
      %c0_28 = arith.constant 0 : index
      %c0_29 = arith.constant 0 : index
      %39 = vector.load %arg5[%c0_28, %c0_29] : memref<8x8xf32, #tpu.memory_space<vmem>>, vector<8x8xf32>
      tpu.vector_store %arg5[%c0_28, %c0_29], %38 {strides = array<i32>} : memref<8x8xf32, #tpu.memory_space<vmem>>, vector<8x8xf32>,
    } else {
    }
    return
  }
  func.func @transform_0(%arg0: i32, %arg1: i32, %arg2: i32) -> (i32, i32) {
    %c0_i32 = arith.constant 0 : i32
    return %arg0, %arg2 : i32, i32
  }
  func.func @transform_1(%arg0: i32, %arg1: i32, %arg2: i32) -> (i32, i32) {
    %c0_i32 = arith.constant 0 : i32
    return %arg1, %arg2 : i32, i32
  }
  func.func @transform_2(%arg0: i32, %arg1: i32, %arg2: i32) -> (i32, i32) {
    %c0_i32 = arith.constant 0 : i32
    return %arg0, %arg1 : i32, i32
  }
}

</mosaic_0001>

<llo_original>
// kernel: tpu_custom_call.1
$region0: #{tpu_custom_call.1}
  #allocation0 [shape = 'u32[]', space=smem, size = 0x4, offset = 0x4, fixed_abs, tag = 'smem constant byte address 0x4 - core index']
  #allocation1 [shape = 'u32[72,128]{1,0:T(1,128)}', space=vmem, size = 0x9000, scoped, tag = 'internal scratch']
  #allocation2 [shape = 'f32[8,8]{1,0:T(8,128)}', space=vmem, size = 0x1000, scoped, tag = 'scratch operand']
  #allocation3 [shape = 'f32[8,1]{1,0:T(8,128)}', space=vmem, size = 0x1000, scoped, tag = 'scratch operand']
  #allocation4 [shape = 'f32[1,8]{1,0:T(1,128)}', space=vmem, size = 0x200, scoped, tag = 'scratch operand']
  %s0 = inlined_call_operand.hbm [shape: f32[8,32], index: 0, kind: input, shape index: {}]
  %s1 = inlined_call_operand.hbm [shape: f32[8,32], index: 1, kind: input, shape index: {}]
  %s2 = inlined_call_operand.hbm [shape: f32[8,8], index: 2, kind: output, shape index: {}]
  %s3 = sld [smem:[#allocation0]]
  $region42: #{tpu_custom_call.1} parent=0
    _
  %s5 = ssub.s32 1, %s3
  %s6 = scalar_select 0, %s5, %s3
  $region1: #{tpu_custom_call.1} parent=0
    #allocation5 [shape = 'u8[4096]{0}', space=vmem, size = 0x1000, scoped, tag = 'input window, operand 0, single buffered']
    #allocation6 [shape = 's32[1]{0}', space=sflag, size = 0x4, scoped, tag = 'scoped memory for tpu_custom_call.1']
    #allocation7 [shape = 's32[1]{0}', space=sflag, size = 0x4, scoped, tag = 'scoped memory for tpu_custom_call.1']
    #allocation8 [shape = 'u8[4096]{0}', space=vmem, size = 0x1000, scoped, tag = 'input window, operand 1, single buffered']
    #allocation9 [shape = 's32[1]{0}', space=sflag, size = 0x4, scoped, tag = 'scoped memory for tpu_custom_call.1']
    #allocation10 [shape = 'u8[4096]{0}', space=vmem, size = 0x1000, scoped, tag = 'output window, operand 0, single buffered']
    %7 = vsyncpa [#allocation6], 0
    %8 = vsyncpa [#allocation9], 0
    %9 = vsyncpa [#allocation7], 0
    // Predicated region
    $region2: #{tpu_custom_call.1} parent=1 // pred_check
      _
    $region3: #{tpu_custom_call.1} parent=1 // pred_check_branch
      %11 = sbr.rel (0) target = $region5
    $region4: #{tpu_custom_call.1} parent=1 // pred_region
      %13 = vsyncadd [#allocation6], 0
      %s15 = sshll.u32 %s0, 4
      %s16 = int_to_ptr.hbm [resolvable:$true] %s15
      %s17 = sshll.u32 [#allocation5], 4
      %s18 = int_to_ptr.vmem [resolvable:$true] %s17
      %20 = dma.hbm_to_vmem [thread:$0]  %s16, 128, %s18, [#allocation6]
    $region5: #{tpu_custom_call.1} parent=1 // pred_fallthru
      _
    // Predicated region
    $region6: #{tpu_custom_call.1} parent=1 // pred_check
      _
    $region7: #{tpu_custom_call.1} parent=1 // pred_check_branch
      %22 = sbr.rel (0) target = $region9
    $region8: #{tpu_custom_call.1} parent=1 // pred_region
      %24 = vsyncadd [#allocation9], 0
      %s26 = sshll.u32 %s1, 4
      %s27 = int_to_ptr.hbm [resolvable:$true] %s26
      %s28 = sshll.u32 [#allocation8], 4
      %s29 = int_to_ptr.vmem [resolvable:$true] %s28
      %31 = dma.hbm_to_vmem [thread:$0]  %s27, 128, %s29, [#allocation9]
    $region9: #{tpu_custom_call.1} parent=1 // pred_fallthru
      _
    // Predicated region
    $region10: #{tpu_custom_call.1} parent=1 // pred_check
      _
    $region11: #{tpu_custom_call.1} parent=1 // pred_check_branch
      %33 = sbr.rel (0) target = $region13
    $region12: #{tpu_custom_call.1} parent=1 // pred_region
      %35 = dma.done [#allocation6], 128
    $region13: #{tpu_custom_call.1} parent=1 // pred_fallthru
      _
    // Predicated region
    $region14: #{tpu_custom_call.1} parent=1 // pred_check
      _
    $region15: #{tpu_custom_call.1} parent=1 // pred_check_branch
      %37 = sbr.rel (0) target = $region17
    $region16: #{tpu_custom_call.1} parent=1 // pred_region
      %39 = dma.done [#allocation9], 128
    $region17: #{tpu_custom_call.1} parent=1 // pred_fallthru
      _
    %p40 = scmp.eq.s32.totalorder 0, 0
    // Predicated region
    $region18: #{tpu_custom_call.1} parent=1 // pred_check
      %p41 = pneg %p40
    $region19: #{tpu_custom_call.1} parent=1 // pred_check_branch
      %43 = sbr.rel (%p41) target = $region21
    $region20: #{tpu_custom_call.1} parent=1 // pred_region
      %vm44 = vcmask 64512
      %45 = vst.msk [vmem:[#allocation2] sm:$0xff] %vm44, 0.0
      %vm46 = vcmask 57344
      %47 = vst.msk [vmem:[#allocation4] sm:$0x1] %vm46, 0.0
    $region21: #{tpu_custom_call.1} parent=1 // pred_fallthru
      _
    %p48 = scmp.eq.s32.totalorder 0, 0
    %p49 = pnand %p40, %p48
    %p50 = pneg %p49
    // Predicated region
    $region22: #{tpu_custom_call.1} parent=1 // pred_check
      _
    $region23: #{tpu_custom_call.1} parent=1 // pred_check_branch
      %52 = sbr.rel (%p49) target = $region25
    $region24: #{tpu_custom_call.1} parent=1 // pred_region
      %vm53 = vcmask 7168
      %54 = vst.msk [vmem:[#allocation3] sm:$0xff] %vm53, 0.0
    $region25: #{tpu_custom_call.1} parent=1 // pred_fallthru
      _
    %v55 = vld [vmem:[#allocation5] sm:$0xff]
    %v56 = vld [vmem:[#allocation8] sm:$0xff]
    %v57 = vld [vmem:[#allocation2] sm:$0xff]
    %vm58 = vcmask 261120
    %v60 = vsel %vm58, %v55, 0
    %v63 = vsel %vm58, %v56, 0
    %65 = vmatpush.xpose.msra.mxu0 0.0
    %66 = vmatpush.xpose.msra.mxu0 0.0
    %67 = vmatpush.xpose.msra.mxu0 0.0
    %68 = vmatpush.xpose.msra.mxu0 0.0
    %69 = vmatpush.xpose.msra.mxu0 0.0
    %70 = vmatpush.xpose.msra.mxu0 0.0
    %71 = vmatpush.xpose.msra.mxu0 0.0
    %72 = vmatpush.xpose.msra.mxu0 0.0
    %73 = vmatpush.xpose.msra.mxu0 0.0
    %74 = vmatpush.xpose.msra.mxu0 0.0
    %75 = vmatpush.xpose.msra.mxu0 0.0
    %76 = vmatpush.xpose.msra.mxu0 0.0
    %77 = vmatpush.xpose.msra.mxu0 0.0
    %78 = vmatpush.xpose.msra.mxu0 0.0
    %79 = vmatpush.xpose.msra.mxu0 0.0
    %80 = vmatpush.xpose.msra.mxu0 %v63
    %81 = vmatmul.f32.gmra.mxu0 %v60
    %v82 = vpop.f32.mrf.mxu0
    %v83 = vadd.f32 0.0, %v82
    %84 = vdwg.mxu0
    %v85 = vadd.f32 %v57, %v83
    %vm86 = vcmask 64512
    %87 = vst.msk [vmem:[#allocation2] sm:$0xff] %vm86, %v85
    // Predicated region
    $region26: #{tpu_custom_call.1} parent=1 // pred_check
      %p88 = pneg %p48
    $region27: #{tpu_custom_call.1} parent=1 // pred_check_branch
      %90 = sbr.rel (%p88) target = $region29
    $region28: #{tpu_custom_call.1} parent=1 // pred_region
      %v91 = vld [vmem:[#allocation3] sm:$0xff]
      %v92 = vmul.f32 %v55, %v55
      %v93 = vsel %vm58, %v92, 0.0
      %94 = vadd.xlane.f32.xlu0 %v93
      %v95 = vpop.xlane.xlu0 %94
      %v96 = vadd.f32 %v91, %v95
      %vm97 = vcmask 7168
      %98 = vst.msk [vmem:[#allocation3] sm:$0xff] %vm97, %v96
    $region29: #{tpu_custom_call.1} parent=1 // pred_fallthru
      _
    %v99 = vld [vmem:[#allocation4] sm:$0x1]
    %v100 = vmul.f32 %v56, %v56
    %v102 = vsel %vm58, 1.0, 0
    %v105 = vsel %vm58, %v100, 0
    %107 = vmatpush.xpose.msra.mxu0 0.0
    %108 = vmatpush.xpose.msra.mxu0 0.0
    %109 = vmatpush.xpose.msra.mxu0 0.0
    %110 = vmatpush.xpose.msra.mxu0 0.0
    %111 = vmatpush.xpose.msra.mxu0 0.0
    %112 = vmatpush.xpose.msra.mxu0 0.0
    %113 = vmatpush.xpose.msra.mxu0 0.0
    %114 = vmatpush.xpose.msra.mxu0 0.0
    %115 = vmatpush.xpose.msra.mxu0 0.0
    %116 = vmatpush.xpose.msra.mxu0 0.0
    %117 = vmatpush.xpose.msra.mxu0 0.0
    %118 = vmatpush.xpose.msra.mxu0 0.0
    %119 = vmatpush.xpose.msra.mxu0 0.0
    %120 = vmatpush.xpose.msra.mxu0 0.0
    %121 = vmatpush.xpose.msra.mxu0 0.0
    %122 = vmatpush.xpose.msra.mxu0 %v105
    %123 = vmatmul.f32.gmra.mxu0 %v102
    %v124 = vpop.f32.mrf.mxu0
    %v125 = vadd.f32 0.0, %v124
    %126 = vdwg.mxu0
    %v127 = vadd.f32 %v99, %v125
    %vm128 = vcmask 57344
    %129 = vst.msk [vmem:[#allocation4] sm:$0x1] %vm128, %v127
    // Predicated region
    $region30: #{tpu_custom_call.1} parent=1 // pred_check
      %p130 = pneg %p40
    $region31: #{tpu_custom_call.1} parent=1 // pred_check_branch
      %132 = sbr.rel (%p130) target = $region33
    $region32: #{tpu_custom_call.1} parent=1 // pred_region
      %v133 = vld [vmem:[#allocation3] sm:$0xff]
      %v134 = vmax.f32 %v133, 1e-16
      %v135 = vrsqrt.pop %v134
      %v136 = vmul.f32 %v135, %v134
      %v137 = vmul.f32 %v136, %v135
      %v138 = vmul.f32 0.5, %v137
      %v139 = vsub.f32 1.5, %v138
      %v140 = vmul.f32 %v135, %v139
      %vm141 = vweird.f32 %v134
      %vm142 = vweird.f32 %v135
      %vm143 = vmor %vm141, %vm142
      %v144 = vsel %vm143, %v135, %v140
      %v145 = vld [vmem:[#allocation4] sm:$0x1]
      %v146 = vmax.f32 %v145, 1e-16
      %v147 = vrsqrt.pop %v146
      %v148 = vmul.f32 %v147, %v146
      %v149 = vmul.f32 %v148, %v147
      %v150 = vmul.f32 0.5, %v149
      %v151 = vsub.f32 1.5, %v150
      %v152 = vmul.f32 %v147, %v151
      %vm153 = vweird.f32 %v146
      %vm154 = vweird.f32 %v147
      %vm155 = vmor %vm153, %vm154
      %v156 = vsel %vm155, %v147, %v152
      %v157 = vld [vmem:[#allocation2] sm:$0xff]
      %159 = vset.pattern.permute.xlu0 0
      %160 = vperm.xlu0 %159, %v144
      %v161 = vpop.permute.xlu0 %160
      %v163 = vmul.f32 %v157, %v161
      %v165 = vperm.slane %v156, 0
      %v167 = vmul.f32 %v163, %v165
      %168 = vst.msk [vmem:[#allocation10] sm:$0xff] %vm86, %v167
    $region33: #{tpu_custom_call.1} parent=1 // pred_fallthru
      _
    // Predicated region
    $region34: #{tpu_custom_call.1} parent=1 // pred_check
      _
    $region35: #{tpu_custom_call.1} parent=1 // pred_check_branch
      %170 = sbr.rel (0) target = $region37
    $region36: #{tpu_custom_call.1} parent=1 // pred_region
      %172 = vsyncadd [#allocation7], 0
      %s174 = sshll.u32 [#allocation10], 4
      %s175 = int_to_ptr.vmem [resolvable:$true] %s174
      %s176 = sshll.u32 %s2, 4
      %s177 = int_to_ptr.hbm [resolvable:$true] %s176
      %179 = dma.vmem_to_hbm [thread:$0]  %s175, 128, %s177, [#allocation7]
    $region37: #{tpu_custom_call.1} parent=1 // pred_fallthru
      _
    // Predicated region
    $region38: #{tpu_custom_call.1} parent=1 // pred_check
      _
    $region39: #{tpu_custom_call.1} parent=1 // pred_check_branch
      %181 = sbr.rel (0) target = $region41
    $region40: #{tpu_custom_call.1} parent=1 // pred_region
      %183 = dma.done [#allocation7], 128
    $region41: #{tpu_custom_call.1} parent=1 // pred_fallthru
      _
    %184 = vsyncpa [#allocation6], 1
    %185 = vsyncpa [#allocation9], 1
    %186 = vsyncpa [#allocation7], 1

</llo_original>
